<compile_context>
chip_gen: v7x
topology: tpu7x:2x2x1
jax: 0.10.0
libtpu: 0.0.40
codegen_flags: <defaults>
</compile_context>

<pallas_src>
import jax
import jax.numpy as jnp
from jax.experimental import pallas as pl
from jax.experimental.pallas import tpu as pltpu


def _leaky_relu(x, slope=0.2):
    return jnp.where(x >= 0, x, slope * x)


def _round_up(x, m):
    return (x + m - 1) // m * m


def _vmem_capacity_bytes():
    """Device VMEM capacity; conservative 64 MiB (v7x per-TC) if unknown."""
    try:
        cap = getattr(pltpu.get_tpu_info(), "vmem_capacity_bytes", None)
        if cap:
            return int(cap)
    except Exception:
        pass
    return 64 << 20


def _make_encoder2_kernel(fuse_first, n_hidden, dz_pad):
    """Builds the fused kernel. Ref order:
       (xin, cond, [w_in | w_in_a, w_in_b], b_in, *hidden_w_b..., wh, bh, eps,
        z_out, ml_out)"""

    def kernel(*refs):
        if fuse_first:
            xin_ref, cond_ref, w_in_ref, b_in_ref = refs[:4]
            rest = refs[4:]
            # VMEM-only staging of concat(inputs, conditions): one MXU pass.
            x = jnp.concatenate([xin_ref[...], cond_ref[...]], axis=-1)
            h = jnp.dot(x, w_in_ref[...], preferred_element_type=jnp.float32)
        else:
            xin_ref, cond_ref, wa_ref, wb_ref, b_in_ref = refs[:5]
            rest = refs[5:]
            h = jnp.dot(xin_ref[...], wa_ref[...],
                        preferred_element_type=jnp.float32)
            h = h + jnp.dot(cond_ref[...], wb_ref[...],
                            preferred_element_type=jnp.float32)

        # Bias add + LeakyReLU in f32 (accumulator dtype).
        h = _leaky_relu(h + b_in_ref[...])

        # Hidden blocks (statically unrolled).
        for layer in range(n_hidden):
            w_ref = rest[2 * layer]
            b_ref = rest[2 * layer + 1]
            h = jnp.dot(h.astype(w_ref.dtype), w_ref[...],
                        preferred_element_type=jnp.float32)
            h = _leaky_relu(h + b_ref[...])

        wh_ref, bh_ref, eps_ref, z_ref, ml_ref = rest[2 * n_hidden:]

        # Fused [mean | logvar] head, each half lane-padded to dz_pad (128-mult).
        ml = jnp.dot(h.astype(wh_ref.dtype), wh_ref[...],
                     preferred_element_type=jnp.float32) + bh_ref[...]
        mean = ml[:, :dz_pad]          # vreg-aligned slices (dz_pad % 128 == 0)
        logvar = ml[:, dz_pad:]

        # Reparametrize in f32. eps padding columns are zero -> z padding is 0.
        z = mean + eps_ref[...] * jnp.exp(0.5 * logvar)

        # Two lane-dense, full-tile (unmasked) stores; no in-kernel concat.
        z_ref[...] = z.astype(z_ref.dtype)
        ml_ref[...] = ml.astype(ml_ref.dtype)

    return kernel


def encoder2_forward(inputs, conditions, params, eps, *,
                     tile_b=512, matmul_dtype=jnp.float32):
    """Fused Encoder2 forward.

    inputs:     (B, d_in)     float32
    conditions: (B, ncond)    float32
    eps:        (B, d_latent) float32 (the torch.randn_like noise, passed in
                                       so the run is deterministic)
    params:     dict with 'w_in','b_in','hidden' (list of (w,b)),'wm','bm','wl','bl'
                weights stored (in, out), biases (1, out)
    matmul_dtype: jnp.float32 or jnp.bfloat16 (matmul operands only; all
                  accumulation and elementwise math stays f32)
    Returns (z, mean, logvar), each (B, d_latent) float32.
    """
    f32 = jnp.float32
    inputs = inputs.astype(f32)
    conditions = conditions.astype(f32)
    eps = eps.astype(f32)

    B, d_in = inputs.shape
    ncond = conditions.shape[1]
    dz = params["wm"].shape[1]
    dh_in = params["wm"].shape[0]
    dz_pad = _round_up(dz, 128)          # lane-dense head / output width

    # ---- fused, lane-padded [mean | logvar] head ----
    wh = jnp.zeros((dh_in, 2 * dz_pad), f32)
    wh = wh.at[:, :dz].set(params["wm"]).at[:, dz_pad:dz_pad + dz].set(params["wl"])
    bh = jnp.zeros((1, 2 * dz_pad), f32)
    bh = bh.at[:, :dz].set(params["bm"]).at[:, dz_pad:dz_pad + dz].set(params["bl"])

    mm = matmul_dtype
    mm_itemsize = jnp.dtype(mm).itemsize

    # First layer: fuse the concat inside the kernel (one MXU pass) unless both
    # d_in and ncond are already 128-multiples (then the split form is free).
    fuse_first = not (d_in % 128 == 0 and ncond % 128 == 0)
    w_in = params["w_in"]
    if fuse_first:
        first_w = (w_in.astype(mm),)
    else:
        first_w = (w_in[:d_in, :].astype(mm), w_in[d_in:, :].astype(mm))
    b_in = params["b_in"].astype(f32)

    hidden_mm = [(w.astype(mm), b.astype(f32)) for (w, b) in params["hidden"]]
    wh_mm = wh.astype(mm)

    inputs_mm = inputs.astype(mm)
    conditions_mm = conditions.astype(mm)

    # ---- adaptive batch tiling (bounds last-tile padding waste) ----
    tile_b = max(8, min(int(tile_b), _round_up(B, 8)))
    n_tiles = int(pl.cdiv(B, tile_b))
    tile_b = _round_up(int(pl.cdiv(B, n_tiles)), 8)
    b_pad = tile_b * n_tiles
    if b_pad != B:
        pad = b_pad - B
        inputs_mm = jnp.pad(inputs_mm, ((0, pad), (0, 0)))
        conditions_mm = jnp.pad(conditions_mm, ((0, pad), (0, 0)))
    # eps padded in both batch and lane dims (pad lanes are zero -> z pad = 0).
    eps_p = jnp.zeros((b_pad, dz_pad), f32).at[:B, :dz].set(eps)

    weight_args = (*first_w, b_in,
                   *[a for wb in hidden_mm for a in wb],
                   wh_mm, bh)

    # ---- cost estimate / VMEM budget from the real footprint ----
    h_widths = [b_in.shape[1]] + [b.shape[1] for _, b in hidden_mm]
    k_dims = [d_in + ncond] + [w.shape[0] for w, _ in hidden_mm]
    flops = 2 * b_pad * (sum(k * n for k, n in zip(k_dims, h_widths))
                         + dh_in * 2 * dz_pad)
    weight_bytes = sum(int(a.size) * a.dtype.itemsize for a in weight_args)
    bytes_accessed = (weight_bytes
                      + b_pad * ((d_in + ncond) * mm_itemsize + dz_pad * 4)
                      + b_pad * 3 * dz_pad * 4)

    def _vmem_limit(single_buffer):
        wbuf = 1 if single_buffer else 2
        in_tile = tile_b * ((d_in + ncond) * mm_itemsize + dz_pad * 4)
        out_tile = tile_b * 3 * dz_pad * 4
        interm = tile_b * 4 * (sum(h_widths) + 2 * dz_pad)   # f32 intermediates
        footprint = weight_bytes * wbuf + 2 * (in_tile + out_tile) + interm
        cap = _vmem_capacity_bytes()
        return int(min(max(footprint + (8 << 20), 16 << 20), int(cap * 0.9)))

    kernel = _make_encoder2_kernel(fuse_first, len(hidden_mm), dz_pad)
    args = (inputs_mm, conditions_mm, *weight_args, eps_p)

    def batch_spec(ncols):
        return pl.BlockSpec((tile_b, ncols), lambda i: (i, 0))

    def resident_spec(shape, single_buffer):
        # Whole-array block, constant index -> VMEM-resident across the grid.
        if single_buffer:
            return pl.BlockSpec(shape, lambda i: (0, 0),
                                pipeline_mode=pl.Buffered(1))
        return pl.BlockSpec(shape, lambda i: (0, 0))

    def _call(single_buffer):
        in_specs = ([batch_spec(d_in), batch_spec(ncond)]
                    + [resident_spec(a.shape, single_buffer) for a in weight_args]
                    + [batch_spec(dz_pad)])
        return pl.pallas_call(
            kernel,
            grid=(n_tiles,),
            in_specs=in_specs,
            out_specs=(
                pl.BlockSpec((tile_b, dz_pad), lambda i: (i, 0)),       # z
                pl.BlockSpec((tile_b, 2 * dz_pad), lambda i: (i, 0)),   # [mean|logvar]
            ),
            out_shape=(
                jax.ShapeDtypeStruct((b_pad, dz_pad), f32),
                jax.ShapeDtypeStruct((b_pad, 2 * dz_pad), f32),
            ),
            compiler_params=pltpu.CompilerParams(
                # batch tiles are independent; near-neutral on v5e/v6e, lets
                # v7x shard tiles across its two TensorCores.
                dimension_semantics=("parallel",),
                vmem_limit_bytes=_vmem_limit(single_buffer),
            ),
            cost_estimate=pl.CostEstimate(
                flops=int(flops),
                transcendentals=int(b_pad * dz_pad),
                bytes_accessed=int(bytes_accessed),
            ),
        )(*args)

    try:
        z_out, ml_out = _call(single_buffer=True)
    except Exception:
        # pl.Buffered(1) single-buffering not supported on this jax build;
        # fall back to default double-buffered resident weights.
        z_out, ml_out = _call(single_buffer=False)

    z = z_out[:B, :dz]
    mean = ml_out[:B, :dz]
    logvar = ml_out[:B, dz_pad:dz_pad + dz]
    return z, mean, logvar


def init_params(key, in_config, ncond):
    """Deterministic synthetic parameters matching Encoder2.__init__ shapes."""
    def lin(k, fan_in, fan_out):
        kw, kb = jax.random.split(k)
        s = float(fan_in) ** -0.5
        w = jax.random.uniform(kw, (fan_in, fan_out), jnp.float32, -s, s)
        b = jax.random.uniform(kb, (1, fan_out), jnp.float32, -s, s)
        return w, b

    n_hidden = len(in_config) - 2
    keys = jax.random.split(key, n_hidden + 3)
    w_in, b_in = lin(keys[0], in_config[0]["in"] + ncond, in_config[0]["out"])
    hidden = [lin(keys[1 + i], in_config[1 + i]["in"], in_config[1 + i]["out"])
              for i in range(n_hidden)]
    wm, bm = lin(keys[n_hidden + 1], in_config[-1]["in"], in_config[-1]["out"])
    wl, bl = lin(keys[n_hidden + 2], in_config[-1]["in"], in_config[-1]["out"])
    return dict(w_in=w_in, b_in=b_in, hidden=hidden, wm=wm, bm=bm, wl=wl, bl=bl)


def reference_forward(inputs, conditions, params, eps):
    """Pure-JAX reference matching the PyTorch forward (highest precision)."""
    hp = jax.lax.Precision.HIGHEST
    x = jnp.concatenate([inputs, conditions], axis=-1)
    h = jnp.dot(x, params["w_in"], precision=hp) + params["b_in"]
    h = jnp.where(h >= 0, h, 0.2 * h)
    for w, b in params["hidden"]:
        h = jnp.dot(h, w, precision=hp) + b
        h = jnp.where(h >= 0, h, 0.2 * h)
    mean = jnp.dot(h, params["wm"], precision=hp) + params["bm"]
    logvar = jnp.dot(h, params["wl"], precision=hp) + params["bl"]
    z = mean + eps * jnp.exp(0.5 * logvar)
    return z, mean, logvar


def _check(got, ref, tol, name):
    assert jnp.allclose(got, ref, atol=tol, rtol=tol), f"{name} mismatch"


if __name__ == "__main__":
    key = jax.random.PRNGKey(0)

    # ---- Config A: matches the demo Encoder2 (one hidden block) ----
    in_config = [{"in": 16, "out": 32},
                 {"in": 32, "out": 32},
                 {"in": 32, "out": 8}]
    ncond, batch = 4, 8
    k_in, k_cond, k_eps, k_par, k2 = jax.random.split(key, 5)
    inputs = jax.random.normal(k_in, (batch, in_config[0]["in"]), jnp.float32)
    conditions = jax.random.normal(k_cond, (batch, ncond), jnp.float32)
    eps = jax.random.normal(k_eps, (batch, in_config[-1]["out"]), jnp.float32)
    params = init_params(k_par, in_config, ncond)

    z_r, m_r, l_r = reference_forward(inputs, conditions, params, eps)

    # f32 matmul operands (tolerance absorbs MXU f32-pass accumulation diffs).
    z, mean, logvar = encoder2_forward(inputs, conditions, params, eps)
    jax.block_until_ready((z, mean, logvar))
    _check(mean, m_r, 1e-2, "mean")
    _check(logvar, l_r, 1e-2, "logvar")
    _check(z, z_r, 1e-2, "z")

    # bf16 matmul operands, f32 accumulation / elementwise (looser tolerance).
    z16, m16, l16 = encoder2_forward(inputs, conditions, params, eps,
                                     matmul_dtype=jnp.bfloat16)
    jax.block_until_ready((z16, m16, l16))
    _check(m16, m_r, 7e-2, "mean (bf16)")
    _check(l16, l_r, 7e-2, "logvar (bf16)")
    _check(z16, z_r, 7e-2, "z (bf16)")

    # ---- Config B: deeper config + awkward batch -> multi-tile grid + padding ----
    in_config2 = [{"in": 24, "out": 48},
                  {"in": 48, "out": 48},
                  {"in": 48, "out": 32},
                  {"in": 32, "out": 8}]
    ncond2, batch2 = 4, 50
    k_in2, k_cond2, k_eps2, k_par2 = jax.random.split(k2, 4)
    inputs2 = jax.random.normal(k_in2, (batch2, in_config2[0]["in"]), jnp.float32)
    conditions2 = jax.random.normal(k_cond2, (batch2, ncond2), jnp.float32)
    eps2 = jax.random.normal(k_eps2, (batch2, in_config2[-1]["out"]), jnp.float32)
    params2 = init_params(k_par2, in_config2, ncond2)

    z2, m2, l2 = encoder2_forward(inputs2, conditions2, params2, eps2, tile_b=16)
    jax.block_until_ready((z2, m2, l2))
    z2_r, m2_r, l2_r = reference_forward(inputs2, conditions2, params2, eps2)
    _check(m2, m2_r, 1e-2, "mean (deep)")
    _check(l2, l2_r, 1e-2, "logvar (deep)")
    _check(z2, z2_r, 1e-2, "z (deep)")

    print("KERNEL_OK")
</pallas_src>

<mosaic_0001>
module attributes {stable_mosaic.version = 11 : i64} {
  func.func @kernel(%arg0: i32, %arg1: memref<8x16xf32, #tpu.memory_space<vmem>>, %arg2: memref<8x4xf32, #tpu.memory_space<vmem>>, %arg3: memref<20x32xf32, #tpu.memory_space<vmem>>, %arg4: memref<1x32xf32, #tpu.memory_space<vmem>>, %arg5: memref<32x32xf32, #tpu.memory_space<vmem>>, %arg6: memref<1x32xf32, #tpu.memory_space<vmem>>, %arg7: memref<32x256xf32, #tpu.memory_space<vmem>>, %arg8: memref<1x256xf32, #tpu.memory_space<vmem>>, %arg9: memref<8x128xf32, #tpu.memory_space<vmem>>, %arg10: memref<8x128xf32, #tpu.memory_space<vmem>>, %arg11: memref<8x256xf32, #tpu.memory_space<vmem>>) attributes {dimension_semantics = [#tpu.dimension_semantics<parallel>], iteration_bounds = array<i64: 1>, scalar_prefetch = 0 : i64, scratch_operands = 0 : i64, tpu.core_type = #tpu.core_type<tc>, window_params = [{transform_indices = @transform_0, window_bounds = array<i64: 8, 16>}, {transform_indices = @transform_1, window_bounds = array<i64: 8, 4>}, {pipeline_mode = #tpu.pipeline_mode<synchronous>, transform_indices = @transform_2, window_bounds = array<i64: 20, 32>}, {pipeline_mode = #tpu.pipeline_mode<synchronous>, transform_indices = @transform_3, window_bounds = array<i64: 1, 32>}, {pipeline_mode = #tpu.pipeline_mode<synchronous>, transform_indices = @transform_4, window_bounds = array<i64: 32, 32>}, {pipeline_mode = #tpu.pipeline_mode<synchronous>, transform_indices = @transform_5, window_bounds = array<i64: 1, 32>}, {pipeline_mode = #tpu.pipeline_mode<synchronous>, transform_indices = @transform_6, window_bounds = array<i64: 32, 256>}, {pipeline_mode = #tpu.pipeline_mode<synchronous>, transform_indices = @transform_7, window_bounds = array<i64: 1, 256>}, {transform_indices = @transform_8, window_bounds = array<i64: 8, 128>}, {transform_indices = @transform_9, window_bounds = array<i64: 8, 128>}, {transform_indices = @transform_10, window_bounds = array<i64: 8, 256>}]} {
    %c0 = arith.constant 0 : index
    %c0_0 = arith.constant 0 : index
    %0 = vector.load %arg1[%c0, %c0_0] : memref<8x16xf32, #tpu.memory_space<vmem>>, vector<8x16xf32>
    %c0_1 = arith.constant 0 : index
    %c0_2 = arith.constant 0 : index
    %1 = vector.load %arg2[%c0_1, %c0_2] : memref<8x4xf32, #tpu.memory_space<vmem>>, vector<8x4xf32>
    %2 = tpu.concatenate %0, %1 in 1 : vector<8x16xf32>, vector<8x4xf32> -> vector<8x20xf32>
    %c0_3 = arith.constant 0 : index
    %c0_4 = arith.constant 0 : index
    %3 = vector.load %arg3[%c0_3, %c0_4] : memref<20x32xf32, #tpu.memory_space<vmem>>, vector<20x32xf32>
    %cst = arith.constant dense<0.000000e+00> : vector<8x32xf32>
    %4 = tpu.matmul %2, %3, %cst {dimension_numbers = #tpu.dot_dimension_numbers<[1], [0], [0], [1], [0, 0, 1, 1], [], []>} : vector<8x20xf32>, vector<20x32xf32>, vector<8x32xf32> -> vector<8x32xf32>
    %c0_5 = arith.constant 0 : index
    %c0_6 = arith.constant 0 : index
    %5 = vector.load %arg4[%c0_5, %c0_6] : memref<1x32xf32, #tpu.memory_space<vmem>>, vector<1x32xf32>
    %6 = vector.broadcast %5 : vector<1x32xf32> to vector<8x32xf32>
    %7 = arith.addf %4, %6 : vector<8x32xf32>
    %cst_7 = arith.constant 0.000000e+00 : f32
    %8 = vector.broadcast %cst_7 : f32 to vector<8x32xf32>
    %9 = arith.cmpf oge, %7, %8 : vector<8x32xf32>
    %cst_8 = arith.constant 2.000000e-01 : f32
    %10 = vector.broadcast %cst_8 : f32 to vector<8x32xf32>
    %11 = arith.mulf %10, %7 : vector<8x32xf32>
    %12 = arith.select %9, %7, %11 : vector<8x32xi1>, vector<8x32xf32>
    %c0_9 = arith.constant 0 : index
    %c0_10 = arith.constant 0 : index
    %13 = vector.load %arg5[%c0_9, %c0_10] : memref<32x32xf32, #tpu.memory_space<vmem>>, vector<32x32xf32>
    %cst_11 = arith.constant dense<0.000000e+00> : vector<8x32xf32>
    %14 = tpu.matmul %12, %13, %cst_11 {dimension_numbers = #tpu.dot_dimension_numbers<[1], [0], [0], [1], [0, 0, 1, 1], [], []>} : vector<8x32xf32>, vector<32x32xf32>, vector<8x32xf32> -> vector<8x32xf32>
    %c0_12 = arith.constant 0 : index
    %c0_13 = arith.constant 0 : index
    %15 = vector.load %arg6[%c0_12, %c0_13] : memref<1x32xf32, #tpu.memory_space<vmem>>, vector<1x32xf32>
    %16 = vector.broadcast %15 : vector<1x32xf32> to vector<8x32xf32>
    %17 = arith.addf %14, %16 : vector<8x32xf32>
    %cst_14 = arith.constant 0.000000e+00 : f32
    %18 = vector.broadcast %cst_14 : f32 to vector<8x32xf32>
    %19 = arith.cmpf oge, %17, %18 : vector<8x32xf32>
    %cst_15 = arith.constant 2.000000e-01 : f32
    %20 = vector.broadcast %cst_15 : f32 to vector<8x32xf32>
    %21 = arith.mulf %20, %17 : vector<8x32xf32>
    %22 = arith.select %19, %17, %21 : vector<8x32xi1>, vector<8x32xf32>
    %c0_16 = arith.constant 0 : index
    %c0_17 = arith.constant 0 : index
    %23 = vector.load %arg7[%c0_16, %c0_17] : memref<32x256xf32, #tpu.memory_space<vmem>>, vector<32x256xf32>
    %cst_18 = arith.constant dense<0.000000e+00> : vector<8x256xf32>
    %24 = tpu.matmul %22, %23, %cst_18 {dimension_numbers = #tpu.dot_dimension_numbers<[1], [0], [0], [1], [0, 0, 1, 1], [], []>} : vector<8x32xf32>, vector<32x256xf32>, vector<8x256xf32> -> vector<8x256xf32>
    %c0_19 = arith.constant 0 : index
    %c0_20 = arith.constant 0 : index
    %25 = vector.load %arg8[%c0_19, %c0_20] : memref<1x256xf32, #tpu.memory_space<vmem>>, vector<1x256xf32>
    %26 = vector.broadcast %25 : vector<1x256xf32> to vector<8x256xf32>
    %27 = arith.addf %24, %26 : vector<8x256xf32>
    %28 = vector.extract_strided_slice %27 {offsets = [0, 0], sizes = [8, 128], strides = [1, 1]} : vector<8x256xf32> to vector<8x128xf32>
    %29 = vector.extract_strided_slice %27 {offsets = [0, 128], sizes = [8, 128], strides = [1, 1]} : vector<8x256xf32> to vector<8x128xf32>
    %c0_21 = arith.constant 0 : index
    %c0_22 = arith.constant 0 : index
    %30 = vector.load %arg9[%c0_21, %c0_22] : memref<8x128xf32, #tpu.memory_space<vmem>>, vector<8x128xf32>
    %cst_23 = arith.constant 5.000000e-01 : f32
    %31 = vector.broadcast %cst_23 : f32 to vector<8x128xf32>
    %32 = arith.mulf %31, %29 : vector<8x128xf32>
    %33 = math.exp %32 : vector<8x128xf32>
    %34 = arith.mulf %30, %33 : vector<8x128xf32>
    %35 = arith.addf %28, %34 : vector<8x128xf32>
    %c0_24 = arith.constant 0 : index
    %c0_25 = arith.constant 0 : index
    %36 = vector.load %arg10[%c0_24, %c0_25] : memref<8x128xf32, #tpu.memory_space<vmem>>, vector<8x128xf32>
    tpu.vector_store %arg10[%c0_24, %c0_25], %35 {strides = array<i32>} : memref<8x128xf32, #tpu.memory_space<vmem>>, vector<8x128xf32>,
    %c0_26 = arith.constant 0 : index
    %c0_27 = arith.constant 0 : index
    %37 = vector.load %arg11[%c0_26, %c0_27] : memref<8x256xf32, #tpu.memory_space<vmem>>, vector<8x256xf32>
    tpu.vector_store %arg11[%c0_26, %c0_27], %27 {strides = array<i32>} : memref<8x256xf32, #tpu.memory_space<vmem>>, vector<8x256xf32>,
    return
  }
  func.func @transform_0(%arg0: i32) -> (i32, i32) {
    %c0_i32 = arith.constant 0 : i32
    %c0_i32_0 = arith.constant 0 : i32
    return %arg0, %c0_i32 : i32, i32
  }
  func.func @transform_1(%arg0: i32) -> (i32, i32) {
    %c0_i32 = arith.constant 0 : i32
    %c0_i32_0 = arith.constant 0 : i32
    return %arg0, %c0_i32 : i32, i32
  }
  func.func @transform_2(%arg0: i32) -> (i32, i32) {
    %c0_i32 = arith.constant 0 : i32
    %c0_i32_0 = arith.constant 0 : i32
    %c0_i32_1 = arith.constant 0 : i32
    return %c0_i32, %c0_i32_0 : i32, i32
  }
  func.func @transform_3(%arg0: i32) -> (i32, i32) {
    %c0_i32 = arith.constant 0 : i32
    %c0_i32_0 = arith.constant 0 : i32
    %c0_i32_1 = arith.constant 0 : i32
    return %c0_i32, %c0_i32_0 : i32, i32
  }
  func.func @transform_4(%arg0: i32) -> (i32, i32) {
    %c0_i32 = arith.constant 0 : i32
    %c0_i32_0 = arith.constant 0 : i32
    %c0_i32_1 = arith.constant 0 : i32
    return %c0_i32, %c0_i32_0 : i32, i32
  }
  func.func @transform_5(%arg0: i32) -> (i32, i32) {
    %c0_i32 = arith.constant 0 : i32
    %c0_i32_0 = arith.constant 0 : i32
    %c0_i32_1 = arith.constant 0 : i32
    return %c0_i32, %c0_i32_0 : i32, i32
  }
  func.func @transform_6(%arg0: i32) -> (i32, i32) {
    %c0_i32 = arith.constant 0 : i32
    %c0_i32_0 = arith.constant 0 : i32
    %c0_i32_1 = arith.constant 0 : i32
    return %c0_i32, %c0_i32_0 : i32, i32
  }
  func.func @transform_7(%arg0: i32) -> (i32, i32) {
    %c0_i32 = arith.constant 0 : i32
    %c0_i32_0 = arith.constant 0 : i32
    %c0_i32_1 = arith.constant 0 : i32
    return %c0_i32, %c0_i32_0 : i32, i32
  }
  func.func @transform_8(%arg0: i32) -> (i32, i32) {
    %c0_i32 = arith.constant 0 : i32
    %c0_i32_0 = arith.constant 0 : i32
    return %arg0, %c0_i32 : i32, i32
  }
  func.func @transform_9(%arg0: i32) -> (i32, i32) {
    %c0_i32 = arith.constant 0 : i32
    %c0_i32_0 = arith.constant 0 : i32
    return %arg0, %c0_i32 : i32, i32
  }
  func.func @transform_10(%arg0: i32) -> (i32, i32) {
    %c0_i32 = arith.constant 0 : i32
    %c0_i32_0 = arith.constant 0 : i32
    return %arg0, %c0_i32 : i32, i32
  }
}

module attributes {stable_mosaic.version = 11 : i64} {
  func.func @kernel(%arg0: i32, %arg1: memref<8x16xf32, #tpu.memory_space<vmem>>, %arg2: memref<8x4xf32, #tpu.memory_space<vmem>>, %arg3: memref<20x32xf32, #tpu.memory_space<vmem>>, %arg4: memref<1x32xf32, #tpu.memory_space<vmem>>, %arg5: memref<32x32xf32, #tpu.memory_space<vmem>>, %arg6: memref<1x32xf32, #tpu.memory_space<vmem>>, %arg7: memref<32x256xf32, #tpu.memory_space<vmem>>, %arg8: memref<1x256xf32, #tpu.memory_space<vmem>>, %arg9: memref<8x128xf32, #tpu.memory_space<vmem>>, %arg10: memref<8x128xf32, #tpu.memory_space<vmem>>, %arg11: memref<8x256xf32, #tpu.memory_space<vmem>>) attributes {dimension_semantics = [#tpu.dimension_semantics<parallel>], iteration_bounds = array<i64: 1>, scalar_prefetch = 0 : i64, scratch_operands = 0 : i64, tpu.core_type = #tpu.core_type<tc>, window_params = [{transform_indices = @transform_0, window_bounds = array<i64: 8, 16>}, {transform_indices = @transform_1, window_bounds = array<i64: 8, 4>}, {pipeline_mode = #tpu.pipeline_mode<synchronous>, transform_indices = @transform_2, window_bounds = array<i64: 20, 32>}, {pipeline_mode = #tpu.pipeline_mode<synchronous>, transform_indices = @transform_3, window_bounds = array<i64: 1, 32>}, {pipeline_mode = #tpu.pipeline_mode<synchronous>, transform_indices = @transform_4, window_bounds = array<i64: 32, 32>}, {pipeline_mode = #tpu.pipeline_mode<synchronous>, transform_indices = @transform_5, window_bounds = array<i64: 1, 32>}, {pipeline_mode = #tpu.pipeline_mode<synchronous>, transform_indices = @transform_6, window_bounds = array<i64: 32, 256>}, {pipeline_mode = #tpu.pipeline_mode<synchronous>, transform_indices = @transform_7, window_bounds = array<i64: 1, 256>}, {transform_indices = @transform_8, window_bounds = array<i64: 8, 128>}, {transform_indices = @transform_9, window_bounds = array<i64: 8, 128>}, {transform_indices = @transform_10, window_bounds = array<i64: 8, 256>}]} {
    %c0 = arith.constant 0 : index
    %c0_0 = arith.constant 0 : index
    %0 = vector.load %arg1[%c0, %c0_0] : memref<8x16xf32, #tpu.memory_space<vmem>>, vector<8x16xf32>
    %c0_1 = arith.constant 0 : index
    %c0_2 = arith.constant 0 : index
    %1 = vector.load %arg2[%c0_1, %c0_2] : memref<8x4xf32, #tpu.memory_space<vmem>>, vector<8x4xf32>
    %2 = tpu.concatenate %0, %1 in 1 : vector<8x16xf32>, vector<8x4xf32> -> vector<8x20xf32>
    %c0_3 = arith.constant 0 : index
    %c0_4 = arith.constant 0 : index
    %3 = vector.load %arg3[%c0_3, %c0_4] : memref<20x32xf32, #tpu.memory_space<vmem>>, vector<20x32xf32>
    %cst = arith.constant dense<0.000000e+00> : vector<8x32xf32>
    %4 = tpu.matmul %2, %3, %cst {dimension_numbers = #tpu.dot_dimension_numbers<[1], [0], [0], [1], [0, 0, 1, 1], [], []>} : vector<8x20xf32>, vector<20x32xf32>, vector<8x32xf32> -> vector<8x32xf32>
    %c0_5 = arith.constant 0 : index
    %c0_6 = arith.constant 0 : index
    %5 = vector.load %arg4[%c0_5, %c0_6] : memref<1x32xf32, #tpu.memory_space<vmem>>, vector<1x32xf32>
    %6 = vector.broadcast %5 : vector<1x32xf32> to vector<8x32xf32>
    %7 = arith.addf %4, %6 : vector<8x32xf32>
    %cst_7 = arith.constant 0.000000e+00 : f32
    %8 = vector.broadcast %cst_7 : f32 to vector<8x32xf32>
    %9 = arith.cmpf oge, %7, %8 : vector<8x32xf32>
    %cst_8 = arith.constant 2.000000e-01 : f32
    %10 = vector.broadcast %cst_8 : f32 to vector<8x32xf32>
    %11 = arith.mulf %10, %7 : vector<8x32xf32>
    %12 = arith.select %9, %7, %11 : vector<8x32xi1>, vector<8x32xf32>
    %c0_9 = arith.constant 0 : index
    %c0_10 = arith.constant 0 : index
    %13 = vector.load %arg5[%c0_9, %c0_10] : memref<32x32xf32, #tpu.memory_space<vmem>>, vector<32x32xf32>
    %cst_11 = arith.constant dense<0.000000e+00> : vector<8x32xf32>
    %14 = tpu.matmul %12, %13, %cst_11 {dimension_numbers = #tpu.dot_dimension_numbers<[1], [0], [0], [1], [0, 0, 1, 1], [], []>} : vector<8x32xf32>, vector<32x32xf32>, vector<8x32xf32> -> vector<8x32xf32>
    %c0_12 = arith.constant 0 : index
    %c0_13 = arith.constant 0 : index
    %15 = vector.load %arg6[%c0_12, %c0_13] : memref<1x32xf32, #tpu.memory_space<vmem>>, vector<1x32xf32>
    %16 = vector.broadcast %15 : vector<1x32xf32> to vector<8x32xf32>
    %17 = arith.addf %14, %16 : vector<8x32xf32>
    %cst_14 = arith.constant 0.000000e+00 : f32
    %18 = vector.broadcast %cst_14 : f32 to vector<8x32xf32>
    %19 = arith.cmpf oge, %17, %18 : vector<8x32xf32>
    %cst_15 = arith.constant 2.000000e-01 : f32
    %20 = vector.broadcast %cst_15 : f32 to vector<8x32xf32>
    %21 = arith.mulf %20, %17 : vector<8x32xf32>
    %22 = arith.select %19, %17, %21 : vector<8x32xi1>, vector<8x32xf32>
    %c0_16 = arith.constant 0 : index
    %c0_17 = arith.constant 0 : index
    %23 = vector.load %arg7[%c0_16, %c0_17] : memref<32x256xf32, #tpu.memory_space<vmem>>, vector<32x256xf32>
    %cst_18 = arith.constant dense<0.000000e+00> : vector<8x256xf32>
    %24 = tpu.matmul %22, %23, %cst_18 {dimension_numbers = #tpu.dot_dimension_numbers<[1], [0], [0], [1], [0, 0, 1, 1], [], []>} : vector<8x32xf32>, vector<32x256xf32>, vector<8x256xf32> -> vector<8x256xf32>
    %c0_19 = arith.constant 0 : index
    %c0_20 = arith.constant 0 : index
    %25 = vector.load %arg8[%c0_19, %c0_20] : memref<1x256xf32, #tpu.memory_space<vmem>>, vector<1x256xf32>
    %26 = vector.broadcast %25 : vector<1x256xf32> to vector<8x256xf32>
    %27 = arith.addf %24, %26 : vector<8x256xf32>
    %28 = vector.extract_strided_slice %27 {offsets = [0, 0], sizes = [8, 128], strides = [1, 1]} : vector<8x256xf32> to vector<8x128xf32>
    %29 = vector.extract_strided_slice %27 {offsets = [0, 128], sizes = [8, 128], strides = [1, 1]} : vector<8x256xf32> to vector<8x128xf32>
    %c0_21 = arith.constant 0 : index
    %c0_22 = arith.constant 0 : index
    %30 = vector.load %arg9[%c0_21, %c0_22] : memref<8x128xf32, #tpu.memory_space<vmem>>, vector<8x128xf32>
    %cst_23 = arith.constant 5.000000e-01 : f32
    %31 = vector.broadcast %cst_23 : f32 to vector<8x128xf32>
    %32 = arith.mulf %31, %29 : vector<8x128xf32>
    %33 = math.exp %32 : vector<8x128xf32>
    %34 = arith.mulf %30, %33 : vector<8x128xf32>
    %35 = arith.addf %28, %34 : vector<8x128xf32>
    %c0_24 = arith.constant 0 : index
    %c0_25 = arith.constant 0 : index
    %36 = vector.load %arg10[%c0_24, %c0_25] : memref<8x128xf32, #tpu.memory_space<vmem>>, vector<8x128xf32>
    tpu.vector_store %arg10[%c0_24, %c0_25], %35 {strides = array<i32>} : memref<8x128xf32, #tpu.memory_space<vmem>>, vector<8x128xf32>,
    %c0_26 = arith.constant 0 : index
    %c0_27 = arith.constant 0 : index
    %37 = vector.load %arg11[%c0_26, %c0_27] : memref<8x256xf32, #tpu.memory_space<vmem>>, vector<8x256xf32>
    tpu.vector_store %arg11[%c0_26, %c0_27], %27 {strides = array<i32>} : memref<8x256xf32, #tpu.memory_space<vmem>>, vector<8x256xf32>,
    return
  }
  func.func @transform_0(%arg0: i32) -> (i32, i32) {
    %c0_i32 = arith.constant 0 : i32
    %c0_i32_0 = arith.constant 0 : i32
    return %arg0, %c0_i32 : i32, i32
  }
  func.func @transform_1(%arg0: i32) -> (i32, i32) {
    %c0_i32 = arith.constant 0 : i32
    %c0_i32_0 = arith.constant 0 : i32
    return %arg0, %c0_i32 : i32, i32
  }
  func.func @transform_2(%arg0: i32) -> (i32, i32) {
    %c0_i32 = arith.constant 0 : i32
    %c0_i32_0 = arith.constant 0 : i32
    %c0_i32_1 = arith.constant 0 : i32
    return %c0_i32, %c0_i32_0 : i32, i32
  }
  func.func @transform_3(%arg0: i32) -> (i32, i32) {
    %c0_i32 = arith.constant 0 : i32
    %c0_i32_0 = arith.constant 0 : i32
    %c0_i32_1 = arith.constant 0 : i32
    return %c0_i32, %c0_i32_0 : i32, i32
  }
  func.func @transform_4(%arg0: i32) -> (i32, i32) {
    %c0_i32 = arith.constant 0 : i32
    %c0_i32_0 = arith.constant 0 : i32
    %c0_i32_1 = arith.constant 0 : i32
    return %c0_i32, %c0_i32_0 : i32, i32
  }
  func.func @transform_5(%arg0: i32) -> (i32, i32) {
    %c0_i32 = arith.constant 0 : i32
    %c0_i32_0 = arith.constant 0 : i32
    %c0_i32_1 = arith.constant 0 : i32
    return %c0_i32, %c0_i32_0 : i32, i32
  }
  func.func @transform_6(%arg0: i32) -> (i32, i32) {
    %c0_i32 = arith.constant 0 : i32
    %c0_i32_0 = arith.constant 0 : i32
    %c0_i32_1 = arith.constant 0 : i32
    return %c0_i32, %c0_i32_0 : i32, i32
  }
  func.func @transform_7(%arg0: i32) -> (i32, i32) {
    %c0_i32 = arith.constant 0 : i32
    %c0_i32_0 = arith.constant 0 : i32
    %c0_i32_1 = arith.constant 0 : i32
    return %c0_i32, %c0_i32_0 : i32, i32
  }
  func.func @transform_8(%arg0: i32) -> (i32, i32) {
    %c0_i32 = arith.constant 0 : i32
    %c0_i32_0 = arith.constant 0 : i32
    return %arg0, %c0_i32 : i32, i32
  }
  func.func @transform_9(%arg0: i32) -> (i32, i32) {
    %c0_i32 = arith.constant 0 : i32
    %c0_i32_0 = arith.constant 0 : i32
    return %arg0, %c0_i32 : i32, i32
  }
  func.func @transform_10(%arg0: i32) -> (i32, i32) {
    %c0_i32 = arith.constant 0 : i32
    %c0_i32_0 = arith.constant 0 : i32
    return %arg0, %c0_i32 : i32, i32
  }
}

</mosaic_0001>

<llo_original>
// kernel: tpu_custom_call.1
$region0: #{tpu_custom_call.1}
  #allocation0 [shape = 'u32[]', space=smem, size = 0x4, offset = 0x4, fixed_abs, tag = 'smem constant byte address 0x4 - core index']
  #allocation1 [shape = 'u32[144,128]{1,0:T(1,128)}', space=vmem, size = 0x12000, scoped, tag = 'internal scratch']
  %s0 = inlined_call_operand.vmem [shape: f32[8,16], index: 0, kind: input, shape index: {}]
  %s1 = inlined_call_operand.vmem [shape: f32[8,4], index: 1, kind: input, shape index: {}]
  %s2 = inlined_call_operand.hbm [shape: f32[20,32], index: 2, kind: input, shape index: {}]
  %s3 = inlined_call_operand.vmem [shape: f32[1,32], index: 3, kind: input, shape index: {}]
  %s4 = inlined_call_operand.hbm [shape: f32[32,32], index: 4, kind: input, shape index: {}]
  %s5 = inlined_call_operand.vmem [shape: f32[1,32], index: 5, kind: input, shape index: {}]
  %s6 = inlined_call_operand.hbm [shape: f32[32,256], index: 6, kind: input, shape index: {}]
  %s7 = inlined_call_operand.vmem [shape: f32[1,256], index: 7, kind: input, shape index: {}]
  %s8 = inlined_call_operand.vmem [shape: f32[8,128], index: 8, kind: input, shape index: {}]
  %s9 = inlined_call_operand.hbm [shape: f32[8,128], index: 9, kind: output, shape index: {0}]
  %s10 = inlined_call_operand.hbm [shape: f32[8,256], index: 10, kind: output, shape index: {1}]
  %11 = xla_tuple %s9, %s10
  %s12 = sld [smem:[#allocation0]]
  $region66: #{tpu_custom_call.1} parent=0
    _
  %s14 = ssub.s32 1, %s12
  %s15 = scalar_select 0, %s14, %s12
  $region1: #{tpu_custom_call.1} parent=0
    #allocation2 [shape = 'u8[12288]{0}', space=vmem, size = 0x3000, scoped, tag = 'input window, operand 2, single buffered']
    #allocation3 [shape = 's32[1]{0}', space=sflag, size = 0x4, scoped, tag = 'scoped memory for tpu_custom_call.1']
    #allocation4 [shape = 's32[1]{0}', space=sflag, size = 0x4, scoped, tag = 'scoped memory for tpu_custom_call.1']
    #allocation5 [shape = 'u8[16384]{0}', space=vmem, size = 0x4000, scoped, tag = 'input window, operand 4, single buffered']
    #allocation6 [shape = 's32[1]{0}', space=sflag, size = 0x4, scoped, tag = 'scoped memory for tpu_custom_call.1']
    #allocation7 [shape = 'u8[32768]{0}', space=vmem, size = 0x8000, scoped, tag = 'input window, operand 6, single buffered']
    #allocation8 [shape = 'u8[4096]{0}', space=vmem, size = 0x1000, scoped, tag = 'output window, operand 0, single buffered']
    #allocation9 [shape = 'u8[8192]{0}', space=vmem, size = 0x2000, scoped, tag = 'output window, operand 1, single buffered']
    #allocation10 [shape = 's32[1]{0}', space=sflag, size = 0x4, scoped, tag = 'scoped memory for tpu_custom_call.1']
    %16 = vsyncpa [#allocation3], 0
    %17 = vsyncpa [#allocation6], 0
    %18 = vsyncpa [#allocation4], 0
    %19 = vsyncpa [#allocation10], 0
    // Predicated region
    $region2: #{tpu_custom_call.1} parent=1 // pred_check
      _
    $region3: #{tpu_custom_call.1} parent=1 // pred_check_branch
      %21 = sbr.rel (0) target = $region5
    $region4: #{tpu_custom_call.1} parent=1 // pred_region
      _
    $region5: #{tpu_custom_call.1} parent=1 // pred_fallthru
      _
    // Predicated region
    $region6: #{tpu_custom_call.1} parent=1 // pred_check
      _
    $region7: #{tpu_custom_call.1} parent=1 // pred_check_branch
      %23 = sbr.rel (0) target = $region9
    $region8: #{tpu_custom_call.1} parent=1 // pred_region
      _
    $region9: #{tpu_custom_call.1} parent=1 // pred_fallthru
      _
    // Predicated region
    $region10: #{tpu_custom_call.1} parent=1 // pred_check
      _
    $region11: #{tpu_custom_call.1} parent=1 // pred_check_branch
      %25 = sbr.rel (0) target = $region13
    $region12: #{tpu_custom_call.1} parent=1 // pred_region
      %s27 = ssub.s32 384, 384
      %28 = vsyncadd [#allocation3], %s27
      %s29 = sshll.u32 [#allocation2], 4
      %s30 = int_to_ptr.vmem [resolvable:$true] %s29
      %35 = dma.hbm_to_vmem [thread:$0]  %s2, 384, %s30, [#allocation3], 128, 128, 8
    $region13: #{tpu_custom_call.1} parent=1 // pred_fallthru
      _
    // Predicated region
    $region14: #{tpu_custom_call.1} parent=1 // pred_check
      _
    $region15: #{tpu_custom_call.1} parent=1 // pred_check_branch
      %37 = sbr.rel (0) target = $region17
    $region16: #{tpu_custom_call.1} parent=1 // pred_region
      _
    $region17: #{tpu_custom_call.1} parent=1 // pred_fallthru
      _
    // Predicated region
    $region18: #{tpu_custom_call.1} parent=1 // pred_check
      _
    $region19: #{tpu_custom_call.1} parent=1 // pred_check_branch
      %39 = sbr.rel (0) target = $region21
    $region20: #{tpu_custom_call.1} parent=1 // pred_region
      %s41 = ssub.s32 512, 512
      %42 = vsyncadd [#allocation6], %s41
      %s43 = sshll.u32 [#allocation5], 4
      %s44 = int_to_ptr.vmem [resolvable:$true] %s43
      %49 = dma.hbm_to_vmem [thread:$0]  %s4, 512, %s44, [#allocation6], 128, 128, 8
    $region21: #{tpu_custom_call.1} parent=1 // pred_fallthru
      _
    // Predicated region
    $region22: #{tpu_custom_call.1} parent=1 // pred_check
      _
    $region23: #{tpu_custom_call.1} parent=1 // pred_check_branch
      %51 = sbr.rel (0) target = $region25
    $region24: #{tpu_custom_call.1} parent=1 // pred_region
      _
    $region25: #{tpu_custom_call.1} parent=1 // pred_fallthru
      _
    // Predicated region
    $region26: #{tpu_custom_call.1} parent=1 // pred_check
      _
    $region27: #{tpu_custom_call.1} parent=1 // pred_check_branch
      %53 = sbr.rel (0) target = $region29
    $region28: #{tpu_custom_call.1} parent=1 // pred_region
      %s55 = ssub.s32 1024, 1024
      %56 = vsyncadd [#allocation6], %s55
      %s57 = sshll.u32 [#allocation7], 4
      %s58 = int_to_ptr.vmem [resolvable:$true] %s57
      %63 = dma.hbm_to_vmem [thread:$0]  %s6, 1024, %s58, [#allocation6], 256, 256, 16
    $region29: #{tpu_custom_call.1} parent=1 // pred_fallthru
      _
    // Predicated region
    $region30: #{tpu_custom_call.1} parent=1 // pred_check
      _
    $region31: #{tpu_custom_call.1} parent=1 // pred_check_branch
      %65 = sbr.rel (0) target = $region33
    $region32: #{tpu_custom_call.1} parent=1 // pred_region
      _
    $region33: #{tpu_custom_call.1} parent=1 // pred_fallthru
      _
    // Predicated region
    $region34: #{tpu_custom_call.1} parent=1 // pred_check
      _
    $region35: #{tpu_custom_call.1} parent=1 // pred_check_branch
      %67 = sbr.rel (0) target = $region37
    $region36: #{tpu_custom_call.1} parent=1 // pred_region
      _
    $region37: #{tpu_custom_call.1} parent=1 // pred_fallthru
      _
    // Predicated region
    $region38: #{tpu_custom_call.1} parent=1 // pred_check
      _
    $region39: #{tpu_custom_call.1} parent=1 // pred_check_branch
      %69 = sbr.rel (0) target = $region41
    $region40: #{tpu_custom_call.1} parent=1 // pred_region
      %70 = dma.done [#allocation3], 384
    $region41: #{tpu_custom_call.1} parent=1 // pred_fallthru
      _
    // Predicated region
    $region42: #{tpu_custom_call.1} parent=1 // pred_check
      _
    $region43: #{tpu_custom_call.1} parent=1 // pred_check_branch
      %72 = sbr.rel (0) target = $region45
    $region44: #{tpu_custom_call.1} parent=1 // pred_region
      %73 = dma.done [#allocation6], 512
    $region45: #{tpu_custom_call.1} parent=1 // pred_fallthru
      _
    // Predicated region
    $region46: #{tpu_custom_call.1} parent=1 // pred_check
      _
    $region47: #{tpu_custom_call.1} parent=1 // pred_check_branch
      %75 = sbr.rel (0) target = $region49
    $region48: #{tpu_custom_call.1} parent=1 // pred_region
      %76 = dma.done [#allocation6], 1024
    $region49: #{tpu_custom_call.1} parent=1 // pred_fallthru
      _
    %v77 = vld [vmem:[%s0] sm:$0xff]
    %v78 = vld [vmem:[%s1] sm:$0xff]
    %80 = vrot.lane.b32.xlu0 %v78, 16
    %v81 = vpop.permute.xlu0 %80
    %vm83 = vcmask 130048
    %v84 = vsel %vm83, %v77, %v81
    %v85 = vld [vmem:[#allocation2] sm:$0xff]
    %v86 = vld [vmem:[#allocation2 + $0x8] sm:$0xff]
    %v87 = vld [vmem:[#allocation2 + $0x10] sm:$0xf]
    %v88 = vld [vmem:[%s3] sm:$0x1]
    %v90 = vlaneseq
    %v91 = vshrl.u32 %v90, 7
    %v92 = vsub.s32 0, %v91
    %v93 = vrot.slane %v88, %v92
    %vm95 = vcmask 162816
    %v97 = vsel %vm95, %v84, 0
    %vm99 = vcmask 1043456
    %v101 = vsel %vm99, %v87, 0
    %103 = vmatprep.subr.mxu0 0.0
    %104 = vmatpush1.msra.mxu0 %v85
    %105 = vmatprep.subr.mxu0 0.0
    %106 = vmatpush1.msra.mxu0 %v86
    %107 = vmatprep.subr.mxu0 0.0
    %108 = vmatpush1.msra.mxu0 %v101
    %109 = vmatprep.subr.mxu0 0.0
    %110 = vmatpush1.msra.mxu0 0.0
    %111 = vmatprep.subr.mxu0 0.0
    %112 = vmatpush1.msra.mxu0 0.0
    %113 = vmatprep.subr.mxu0 0.0
    %114 = vmatpush1.msra.mxu0 0.0
    %115 = vmatprep.subr.mxu0 0.0
    %116 = vmatpush1.msra.mxu0 0.0
    %117 = vmatprep.subr.mxu0 0.0
    %118 = vmatpush1.msra.mxu0 0.0
    %119 = vmatprep.subr.mxu0 0.0
    %120 = vmatpush1.msra.mxu0 0.0
    %121 = vmatprep.subr.mxu0 0.0
    %122 = vmatpush1.msra.mxu0 0.0
    %123 = vmatprep.subr.mxu0 0.0
    %124 = vmatpush1.msra.mxu0 0.0
    %125 = vmatprep.subr.mxu0 0.0
    %126 = vmatpush1.msra.mxu0 0.0
    %127 = vmatprep.subr.mxu0 0.0
    %128 = vmatpush1.msra.mxu0 0.0
    %129 = vmatprep.subr.mxu0 0.0
    %130 = vmatpush1.msra.mxu0 0.0
    %131 = vmatprep.subr.mxu0 0.0
    %132 = vmatpush1.msra.mxu0 0.0
    %133 = vmatprep.subr.mxu0 0.0
    %134 = vmatpush1.msra.mxu0 0.0
    %135 = vmatprep.subr.mxu0 0.0
    %136 = vmatpush1.msra.mxu0 0.0
    %137 = vmatprep.subr.mxu0 0.0
    %138 = vmatpush1.msra.mxu0 0.0
    %139 = vmatprep.subr.mxu0 0.0
    %140 = vmatpush1.msra.mxu0 0.0
    %141 = vmatprep.subr.mxu0 0.0
    %142 = vmatpush1.msra.mxu0 0.0
    %143 = vmatprep.subr.mxu0 0.0
    %144 = vmatpush1.msra.mxu0 0.0
    %145 = vmatprep.subr.mxu0 0.0
    %146 = vmatpush1.msra.mxu0 0.0
    %147 = vmatprep.subr.mxu0 0.0
    %148 = vmatpush1.msra.mxu0 0.0
    %149 = vmatprep.subr.mxu0 0.0
    %150 = vmatpush1.msra.mxu0 0.0
    %151 = vmatprep.subr.mxu0 0.0
    %152 = vmatpush1.msra.mxu0 0.0
    %153 = vmatprep.subr.mxu0 0.0
    %154 = vmatpush1.msra.mxu0 0.0
    %155 = vmatprep.subr.mxu0 0.0
    %156 = vmatpush1.msra.mxu0 0.0
    %157 = vmatprep.subr.mxu0 0.0
    %158 = vmatpush1.msra.mxu0 0.0
    %159 = vmatprep.subr.mxu0 0.0
    %160 = vmatpush1.msra.mxu0 0.0
    %161 = vmatprep.subr.mxu0 0.0
    %162 = vmatpush1.msra.mxu0 0.0
    %163 = vmatprep.subr.mxu0 0.0
    %164 = vmatpush1.msra.mxu0 0.0
    %165 = vmatprep.subr.mxu0 0.0
    %166 = vmatpush1.msra.mxu0 0.0
    %167 = vmatprep.mubr.f32.mxu0 0.0
    %168 = vmatmul.mubr.f32.gmra.mrb[0].mxu0 %v97
    %v169 = vpop.f32.mrb[0].mxu0
    %v170 = vadd.f32 %v93, %v169
    %v171 = vpop.f32.mrb[0].mxu0
    %172 = vdwg.mxu0
    %vm173 = vcmp.ge.f32.partialorder %v170, 0.0
    %v174 = vmul.f32 %v170, 0.2
    %v175 = vsel %vm173, %v170, %v174
    %v176 = vld [vmem:[#allocation5] sm:$0xff]
    %v177 = vld [vmem:[#allocation5 + $0x8] sm:$0xff]
    %v178 = vld [vmem:[#allocation5 + $0x10] sm:$0xff]
    %v179 = vld [vmem:[#allocation5 + $0x18] sm:$0xff]
    %v180 = vld [vmem:[%s5] sm:$0x1]
    %v182 = vlaneseq
    %v183 = vshrl.u32 %v182, 7
    %v184 = vsub.s32 0, %v183
    %v185 = vrot.slane %v180, %v184
    %vm187 = vcmask 261120
    %v189 = vsel %vm187, %v175, 0
    %191 = vmatprep.subr.mxu0 0.0
    %192 = vmatpush1.msra.mxu0 %v176
    %193 = vmatprep.subr.mxu0 0.0
    %194 = vmatpush1.msra.mxu0 %v177
    %195 = vmatprep.subr.mxu0 0.0
    %196 = vmatpush1.msra.mxu0 %v178
    %197 = vmatprep.subr.mxu0 0.0
    %198 = vmatpush1.msra.mxu0 %v179
    %199 = vmatprep.subr.mxu0 0.0
    %200 = vmatpush1.msra.mxu0 0.0
    %201 = vmatprep.subr.mxu0 0.0
    %202 = vmatpush1.msra.mxu0 0.0
    %203 = vmatprep.subr.mxu0 0.0
    %204 = vmatpush1.msra.mxu0 0.0
    %205 = vmatprep.subr.mxu0 0.0
    %206 = vmatpush1.msra.mxu0 0.0
    %207 = vmatprep.subr.mxu0 0.0
    %208 = vmatpush1.msra.mxu0 0.0
    %209 = vmatprep.subr.mxu0 0.0
    %210 = vmatpush1.msra.mxu0 0.0
    %211 = vmatprep.subr.mxu0 0.0
    %212 = vmatpush1.msra.mxu0 0.0
    %213 = vmatprep.subr.mxu0 0.0
    %214 = vmatpush1.msra.mxu0 0.0
    %215 = vmatprep.subr.mxu0 0.0
    %216 = vmatpush1.msra.mxu0 0.0
    %217 = vmatprep.subr.mxu0 0.0
    %218 = vmatpush1.msra.mxu0 0.0
    %219 = vmatprep.subr.mxu0 0.0
    %220 = vmatpush1.msra.mxu0 0.0
    %221 = vmatprep.subr.mxu0 0.0
    %222 = vmatpush1.msra.mxu0 0.0
    %223 = vmatprep.subr.mxu0 0.0
    %224 = vmatpush1.msra.mxu0 0.0
    %225 = vmatprep.subr.mxu0 0.0
    %226 = vmatpush1.msra.mxu0 0.0
    %227 = vmatprep.subr.mxu0 0.0
    %228 = vmatpush1.msra.mxu0 0.0
    %229 = vmatprep.subr.mxu0 0.0
    %230 = vmatpush1.msra.mxu0 0.0
    %231 = vmatprep.subr.mxu0 0.0
    %232 = vmatpush1.msra.mxu0 0.0
    %233 = vmatprep.subr.mxu0 0.0
    %234 = vmatpush1.msra.mxu0 0.0
    %235 = vmatprep.subr.mxu0 0.0
    %236 = vmatpush1.msra.mxu0 0.0
    %237 = vmatprep.subr.mxu0 0.0
    %238 = vmatpush1.msra.mxu0 0.0
    %239 = vmatprep.subr.mxu0 0.0
    %240 = vmatpush1.msra.mxu0 0.0
    %241 = vmatprep.subr.mxu0 0.0
    %242 = vmatpush1.msra.mxu0 0.0
    %243 = vmatprep.subr.mxu0 0.0
    %244 = vmatpush1.msra.mxu0 0.0
    %245 = vmatprep.subr.mxu0 0.0
    %246 = vmatpush1.msra.mxu0 0.0
    %247 = vmatprep.subr.mxu0 0.0
    %248 = vmatpush1.msra.mxu0 0.0
    %249 = vmatprep.subr.mxu0 0.0
    %250 = vmatpush1.msra.mxu0 0.0
    %251 = vmatprep.subr.mxu0 0.0
    %252 = vmatpush1.msra.mxu0 0.0
    %253 = vmatprep.subr.mxu0 0.0
    %254 = vmatpush1.msra.mxu0 0.0
    %255 = vmatprep.mubr.f32.mxu0 0.0
    %256 = vmatmul.mubr.f32.gmra.mrb[0].mxu0 %v189
    %v257 = vpop.f32.mrb[0].mxu0
    %v258 = vadd.f32 %v185, %v257
    %v259 = vpop.f32.mrb[0].mxu0
    %260 = vdwg.mxu0
    %vm261 = vcmp.ge.f32.partialorder %v258, 0.0
    %v262 = vmul.f32 %v258, 0.2
    %v263 = vsel %vm261, %v258, %v262
    %v264 = vld [vmem:[#allocation7] sm:$0xff]
    %v265 = vld [vmem:[#allocation7 + $0x8] sm:$0xff]
    %v266 = vld [vmem:[#allocation7 + $0x10] sm:$0xff]
    %v267 = vld [vmem:[#allocation7 + $0x18] sm:$0xff]
    %v268 = vld [vmem:[#allocation7 + $0x20] sm:$0xff]
    %v269 = vld [vmem:[#allocation7 + $0x28] sm:$0xff]
    %v270 = vld [vmem:[#allocation7 + $0x30] sm:$0xff]
    %v271 = vld [vmem:[#allocation7 + $0x38] sm:$0xff]
    %v272 = vld [vmem:[%s7] sm:$0x3]
    %v274 = vlaneseq
    %v275 = vshrl.u32 %v274, 7
    %v276 = vsub.s32 0, %v275
    %v277 = vrot.slane %v272, %v276
    %v278 = vlaneseq
    %v279 = vshrl.u32 %v278, 7
    %v280 = vsub.s32 1, %v279
    %v281 = vrot.slane %v272, %v280
    %v285 = vsel %vm187, %v263, 0
    %287 = vmatprep.subr.mxu0 %v265
    %288 = vmatpush1.msra.mxu0 %v264
    %289 = vmatprep.subr.mxu0 %v267
    %290 = vmatpush1.msra.mxu0 %v266
    %291 = vmatprep.subr.mxu0 %v269
    %292 = vmatpush1.msra.mxu0 %v268
    %293 = vmatprep.subr.mxu0 %v271
    %294 = vmatpush1.msra.mxu0 %v270
    %295 = vmatprep.subr.mxu0 0.0
    %296 = vmatpush1.msra.mxu0 0.0
    %297 = vmatprep.subr.mxu0 0.0
    %298 = vmatpush1.msra.mxu0 0.0
    %299 = vmatprep.subr.mxu0 0.0
    %300 = vmatpush1.msra.mxu0 0.0
    %301 = vmatprep.subr.mxu0 0.0
    %302 = vmatpush1.msra.mxu0 0.0
    %303 = vmatprep.subr.mxu0 0.0
    %304 = vmatpush1.msra.mxu0 0.0
    %305 = vmatprep.subr.mxu0 0.0
    %306 = vmatpush1.msra.mxu0 0.0
    %307 = vmatprep.subr.mxu0 0.0
    %308 = vmatpush1.msra.mxu0 0.0
    %309 = vmatprep.subr.mxu0 0.0
    %310 = vmatpush1.msra.mxu0 0.0
    %311 = vmatprep.subr.mxu0 0.0
    %312 = vmatpush1.msra.mxu0 0.0
    %313 = vmatprep.subr.mxu0 0.0
    %314 = vmatpush1.msra.mxu0 0.0
    %315 = vmatprep.subr.mxu0 0.0
    %316 = vmatpush1.msra.mxu0 0.0
    %317 = vmatprep.subr.mxu0 0.0
    %318 = vmatpush1.msra.mxu0 0.0
    %319 = vmatprep.subr.mxu0 0.0
    %320 = vmatpush1.msra.mxu0 0.0
    %321 = vmatprep.subr.mxu0 0.0
    %322 = vmatpush1.msra.mxu0 0.0
    %323 = vmatprep.subr.mxu0 0.0
    %324 = vmatpush1.msra.mxu0 0.0
    %325 = vmatprep.subr.mxu0 0.0
    %326 = vmatpush1.msra.mxu0 0.0
    %327 = vmatprep.subr.mxu0 0.0
    %328 = vmatpush1.msra.mxu0 0.0
    %329 = vmatprep.subr.mxu0 0.0
    %330 = vmatpush1.msra.mxu0 0.0
    %331 = vmatprep.subr.mxu0 0.0
    %332 = vmatpush1.msra.mxu0 0.0
    %333 = vmatprep.subr.mxu0 0.0
    %334 = vmatpush1.msra.mxu0 0.0
    %335 = vmatprep.subr.mxu0 0.0
    %336 = vmatpush1.msra.mxu0 0.0
    %337 = vmatprep.subr.mxu0 0.0
    %338 = vmatpush1.msra.mxu0 0.0
    %339 = vmatprep.subr.mxu0 0.0
    %340 = vmatpush1.msra.mxu0 0.0
    %341 = vmatprep.subr.mxu0 0.0
    %342 = vmatpush1.msra.mxu0 0.0
    %343 = vmatprep.subr.mxu0 0.0
    %344 = vmatpush1.msra.mxu0 0.0
    %345 = vmatprep.subr.mxu0 0.0
    %346 = vmatpush1.msra.mxu0 0.0
    %347 = vmatprep.subr.mxu0 0.0
    %348 = vmatpush1.msra.mxu0 0.0
    %349 = vmatprep.subr.mxu0 0.0
    %350 = vmatpush1.msra.mxu0 0.0
    %351 = vmatprep.mubr.f32.mxu0 0.0
    %352 = vmatmul.mubr.f32.gmra.mrb[0].mxu0 %v285
    %v353 = vpop.f32.mrb[0].mxu0
    %v354 = vadd.f32 %v277, %v353
    %v355 = vpop.f32.mrb[0].mxu0
    %v356 = vadd.f32 %v281, %v355
    %357 = vdwg.mxu0
    %v358 = vld [vmem:[%s8] sm:$0xff]
    %v359 = vmul.f32 %v356, 0.5
    %v360 = vmul.f32 %v359, 1.442695
    %v361 = vpow.pop %v360
    %v362 = vmul.f32 %v358, %v361
    %v363 = vadd.f32 %v354, %v362
    %364 = vst [vmem:[#allocation8] sm:$0xff] %v363
    %365 = vst [vmem:[#allocation9] sm:$0xff] %v354
    %366 = vst [vmem:[#allocation9 + $0x8] sm:$0xff] %v356
    // Predicated region
    $region50: #{tpu_custom_call.1} parent=1 // pred_check
      _
    $region51: #{tpu_custom_call.1} parent=1 // pred_check_branch
      %368 = sbr.rel (0) target = $region53
    $region52: #{tpu_custom_call.1} parent=1 // pred_region
      %s370 = ssub.s32 128, 128
      %371 = vsyncadd [#allocation4], %s370
      %s373 = sshll.u32 [#allocation8], 4
      %s374 = int_to_ptr.vmem [resolvable:$true] %s373
      %376 = dma.vmem_to_hbm [thread:$0]  %s374, 128, %s9, [#allocation4]
    $region53: #{tpu_custom_call.1} parent=1 // pred_fallthru
      _
    // Predicated region
    $region54: #{tpu_custom_call.1} parent=1 // pred_check
      _
    $region55: #{tpu_custom_call.1} parent=1 // pred_check_branch
      %378 = sbr.rel (0) target = $region57
    $region56: #{tpu_custom_call.1} parent=1 // pred_region
      %s380 = ssub.s32 256, 256
      %381 = vsyncadd [#allocation10], %s380
      %s383 = sshll.u32 [#allocation9], 4
      %s384 = int_to_ptr.vmem [resolvable:$true] %s383
      %386 = dma.vmem_to_hbm [thread:$0]  %s384, 256, %s10, [#allocation10]
    $region57: #{tpu_custom_call.1} parent=1 // pred_fallthru
      _
    // Predicated region
    $region58: #{tpu_custom_call.1} parent=1 // pred_check
      _
    $region59: #{tpu_custom_call.1} parent=1 // pred_check_branch
      %388 = sbr.rel (0) target = $region61
    $region60: #{tpu_custom_call.1} parent=1 // pred_region
      %389 = dma.done [#allocation4], 128
    $region61: #{tpu_custom_call.1} parent=1 // pred_fallthru
      _
    // Predicated region
    $region62: #{tpu_custom_call.1} parent=1 // pred_check
      _
    $region63: #{tpu_custom_call.1} parent=1 // pred_check_branch
      %391 = sbr.rel (0) target = $region65
    $region64: #{tpu_custom_call.1} parent=1 // pred_region
      %392 = dma.done [#allocation10], 256
    $region65: #{tpu_custom_call.1} parent=1 // pred_fallthru
      _
    %393 = vsyncpa [#allocation3], 1
    %394 = vsyncpa [#allocation6], 1
    %395 = vsyncpa [#allocation4], 1
    %396 = vsyncpa [#allocation10], 1

// kernel: tpu_custom_call.1
$region0: #{tpu_custom_call.1}
  #allocation0 [shape = 'u32[]', space=smem, size = 0x4, offset = 0x4, fixed_abs, tag = 'smem constant byte address 0x4 - core index']
  #allocation1 [shape = 'u32[144,128]{1,0:T(1,128)}', space=vmem, size = 0x12000, scoped, tag = 'internal scratch']
  %s0 = inlined_call_operand.vmem [shape: f32[8,16], index: 0, kind: input, shape index: {}]
  %s1 = inlined_call_operand.vmem [shape: f32[8,4], index: 1, kind: input, shape index: {}]
  %s2 = inlined_call_operand.hbm [shape: f32[20,32], index: 2, kind: input, shape index: {}]
  %s3 = inlined_call_operand.vmem [shape: f32[1,32], index: 3, kind: input, shape index: {}]
  %s4 = inlined_call_operand.hbm [shape: f32[32,32], index: 4, kind: input, shape index: {}]
  %s5 = inlined_call_operand.vmem [shape: f32[1,32], index: 5, kind: input, shape index: {}]
  %s6 = inlined_call_operand.hbm [shape: f32[32,256], index: 6, kind: input, shape index: {}]
  %s7 = inlined_call_operand.vmem [shape: f32[1,256], index: 7, kind: input, shape index: {}]
  %s8 = inlined_call_operand.vmem [shape: f32[8,128], index: 8, kind: input, shape index: {}]
  %s9 = inlined_call_operand.hbm [shape: f32[8,128], index: 9, kind: output, shape index: {0}]
  %s10 = inlined_call_operand.hbm [shape: f32[8,256], index: 10, kind: output, shape index: {1}]
  %11 = xla_tuple %s9, %s10
  %s12 = sld [smem:[#allocation0]]
  $region66: #{tpu_custom_call.1} parent=0
    _
  %s14 = ssub.s32 1, %s12
  %s15 = scalar_select 0, %s14, %s12
  $region1: #{tpu_custom_call.1} parent=0
    #allocation2 [shape = 'u8[12288]{0}', space=vmem, size = 0x3000, scoped, tag = 'input window, operand 2, single buffered']
    #allocation3 [shape = 's32[1]{0}', space=sflag, size = 0x4, scoped, tag = 'scoped memory for tpu_custom_call.1']
    #allocation4 [shape = 's32[1]{0}', space=sflag, size = 0x4, scoped, tag = 'scoped memory for tpu_custom_call.1']
    #allocation5 [shape = 'u8[16384]{0}', space=vmem, size = 0x4000, scoped, tag = 'input window, operand 4, single buffered']
    #allocation6 [shape = 's32[1]{0}', space=sflag, size = 0x4, scoped, tag = 'scoped memory for tpu_custom_call.1']
    #allocation7 [shape = 'u8[32768]{0}', space=vmem, size = 0x8000, scoped, tag = 'input window, operand 6, single buffered']
    #allocation8 [shape = 'u8[4096]{0}', space=vmem, size = 0x1000, scoped, tag = 'output window, operand 0, single buffered']
    #allocation9 [shape = 'u8[8192]{0}', space=vmem, size = 0x2000, scoped, tag = 'output window, operand 1, single buffered']
    #allocation10 [shape = 's32[1]{0}', space=sflag, size = 0x4, scoped, tag = 'scoped memory for tpu_custom_call.1']
    %16 = vsyncpa [#allocation3], 0
    %17 = vsyncpa [#allocation6], 0
    %18 = vsyncpa [#allocation4], 0
    %19 = vsyncpa [#allocation10], 0
    // Predicated region
    $region2: #{tpu_custom_call.1} parent=1 // pred_check
      _
    $region3: #{tpu_custom_call.1} parent=1 // pred_check_branch
      %21 = sbr.rel (0) target = $region5
    $region4: #{tpu_custom_call.1} parent=1 // pred_region
      _
    $region5: #{tpu_custom_call.1} parent=1 // pred_fallthru
      _
    // Predicated region
    $region6: #{tpu_custom_call.1} parent=1 // pred_check
      _
    $region7: #{tpu_custom_call.1} parent=1 // pred_check_branch
      %23 = sbr.rel (0) target = $region9
    $region8: #{tpu_custom_call.1} parent=1 // pred_region
      _
    $region9: #{tpu_custom_call.1} parent=1 // pred_fallthru
      _
    // Predicated region
    $region10: #{tpu_custom_call.1} parent=1 // pred_check
      _
    $region11: #{tpu_custom_call.1} parent=1 // pred_check_branch
      %25 = sbr.rel (0) target = $region13
    $region12: #{tpu_custom_call.1} parent=1 // pred_region
      %s27 = ssub.s32 384, 384
      %28 = vsyncadd [#allocation3], %s27
      %s29 = sshll.u32 [#allocation2], 4
      %s30 = int_to_ptr.vmem [resolvable:$true] %s29
      %35 = dma.hbm_to_vmem [thread:$0]  %s2, 384, %s30, [#allocation3], 128, 128, 8
    $region13: #{tpu_custom_call.1} parent=1 // pred_fallthru
      _
    // Predicated region
    $region14: #{tpu_custom_call.1} parent=1 // pred_check
      _
    $region15: #{tpu_custom_call.1} parent=1 // pred_check_branch
      %37 = sbr.rel (0) target = $region17
    $region16: #{tpu_custom_call.1} parent=1 // pred_region
      _
    $region17: #{tpu_custom_call.1} parent=1 // pred_fallthru
      _
    // Predicated region
    $region18: #{tpu_custom_call.1} parent=1 // pred_check
      _
    $region19: #{tpu_custom_call.1} parent=1 // pred_check_branch
      %39 = sbr.rel (0) target = $region21
    $region20: #{tpu_custom_call.1} parent=1 // pred_region
      %s41 = ssub.s32 512, 512
      %42 = vsyncadd [#allocation6], %s41
      %s43 = sshll.u32 [#allocation5], 4
      %s44 = int_to_ptr.vmem [resolvable:$true] %s43
      %49 = dma.hbm_to_vmem [thread:$0]  %s4, 512, %s44, [#allocation6], 128, 128, 8
    $region21: #{tpu_custom_call.1} parent=1 // pred_fallthru
      _
    // Predicated region
    $region22: #{tpu_custom_call.1} parent=1 // pred_check
      _
    $region23: #{tpu_custom_call.1} parent=1 // pred_check_branch
      %51 = sbr.rel (0) target = $region25
    $region24: #{tpu_custom_call.1} parent=1 // pred_region
      _
    $region25: #{tpu_custom_call.1} parent=1 // pred_fallthru
      _
    // Predicated region
    $region26: #{tpu_custom_call.1} parent=1 // pred_check
      _
    $region27: #{tpu_custom_call.1} parent=1 // pred_check_branch
      %53 = sbr.rel (0) target = $region29
    $region28: #{tpu_custom_call.1} parent=1 // pred_region
      %s55 = ssub.s32 1024, 1024
      %56 = vsyncadd [#allocation6], %s55
      %s57 = sshll.u32 [#allocation7], 4
      %s58 = int_to_ptr.vmem [resolvable:$true] %s57
      %63 = dma.hbm_to_vmem [thread:$0]  %s6, 1024, %s58, [#allocation6], 256, 256, 16
    $region29: #{tpu_custom_call.1} parent=1 // pred_fallthru
      _
    // Predicated region
    $region30: #{tpu_custom_call.1} parent=1 // pred_check
      _
    $region31: #{tpu_custom_call.1} parent=1 // pred_check_branch
      %65 = sbr.rel (0) target = $region33
    $region32: #{tpu_custom_call.1} parent=1 // pred_region
      _
    $region33: #{tpu_custom_call.1} parent=1 // pred_fallthru
      _
    // Predicated region
    $region34: #{tpu_custom_call.1} parent=1 // pred_check
      _
    $region35: #{tpu_custom_call.1} parent=1 // pred_check_branch
      %67 = sbr.rel (0) target = $region37
    $region36: #{tpu_custom_call.1} parent=1 // pred_region
      _
    $region37: #{tpu_custom_call.1} parent=1 // pred_fallthru
      _
    // Predicated region
    $region38: #{tpu_custom_call.1} parent=1 // pred_check
      _
    $region39: #{tpu_custom_call.1} parent=1 // pred_check_branch
      %69 = sbr.rel (0) target = $region41
    $region40: #{tpu_custom_call.1} parent=1 // pred_region
      %70 = dma.done [#allocation3], 384
    $region41: #{tpu_custom_call.1} parent=1 // pred_fallthru
      _
    // Predicated region
    $region42: #{tpu_custom_call.1} parent=1 // pred_check
      _
    $region43: #{tpu_custom_call.1} parent=1 // pred_check_branch
      %72 = sbr.rel (0) target = $region45
    $region44: #{tpu_custom_call.1} parent=1 // pred_region
      %73 = dma.done [#allocation6], 512
    $region45: #{tpu_custom_call.1} parent=1 // pred_fallthru
      _
    // Predicated region
    $region46: #{tpu_custom_call.1} parent=1 // pred_check
      _
    $region47: #{tpu_custom_call.1} parent=1 // pred_check_branch
      %75 = sbr.rel (0) target = $region49
    $region48: #{tpu_custom_call.1} parent=1 // pred_region
      %76 = dma.done [#allocation6], 1024
    $region49: #{tpu_custom_call.1} parent=1 // pred_fallthru
      _
    %v77 = vld [vmem:[%s0] sm:$0xff]
    %v78 = vld [vmem:[%s1] sm:$0xff]
    %80 = vrot.lane.b32.xlu0 %v78, 16
    %v81 = vpop.permute.xlu0 %80
    %vm83 = vcmask 130048
    %v84 = vsel %vm83, %v77, %v81
    %v85 = vld [vmem:[#allocation2] sm:$0xff]
    %v86 = vld [vmem:[#allocation2 + $0x8] sm:$0xff]
    %v87 = vld [vmem:[#allocation2 + $0x10] sm:$0xf]
    %v88 = vld [vmem:[%s3] sm:$0x1]
    %v90 = vlaneseq
    %v91 = vshrl.u32 %v90, 7
    %v92 = vsub.s32 0, %v91
    %v93 = vrot.slane %v88, %v92
    %vm95 = vcmask 162816
    %v97 = vsel %vm95, %v84, 0
    %vm99 = vcmask 1043456
    %v101 = vsel %vm99, %v87, 0
    %103 = vmatprep.subr.mxu0 0.0
    %104 = vmatpush1.msra.mxu0 %v85
    %105 = vmatprep.subr.mxu0 0.0
    %106 = vmatpush1.msra.mxu0 %v86
    %107 = vmatprep.subr.mxu0 0.0
    %108 = vmatpush1.msra.mxu0 %v101
    %109 = vmatprep.subr.mxu0 0.0
    %110 = vmatpush1.msra.mxu0 0.0
    %111 = vmatprep.subr.mxu0 0.0
    %112 = vmatpush1.msra.mxu0 0.0
    %113 = vmatprep.subr.mxu0 0.0
    %114 = vmatpush1.msra.mxu0 0.0
    %115 = vmatprep.subr.mxu0 0.0
    %116 = vmatpush1.msra.mxu0 0.0
    %117 = vmatprep.subr.mxu0 0.0
    %118 = vmatpush1.msra.mxu0 0.0
    %119 = vmatprep.subr.mxu0 0.0
    %120 = vmatpush1.msra.mxu0 0.0
    %121 = vmatprep.subr.mxu0 0.0
    %122 = vmatpush1.msra.mxu0 0.0
    %123 = vmatprep.subr.mxu0 0.0
    %124 = vmatpush1.msra.mxu0 0.0
    %125 = vmatprep.subr.mxu0 0.0
    %126 = vmatpush1.msra.mxu0 0.0
    %127 = vmatprep.subr.mxu0 0.0
    %128 = vmatpush1.msra.mxu0 0.0
    %129 = vmatprep.subr.mxu0 0.0
    %130 = vmatpush1.msra.mxu0 0.0
    %131 = vmatprep.subr.mxu0 0.0
    %132 = vmatpush1.msra.mxu0 0.0
    %133 = vmatprep.subr.mxu0 0.0
    %134 = vmatpush1.msra.mxu0 0.0
    %135 = vmatprep.subr.mxu0 0.0
    %136 = vmatpush1.msra.mxu0 0.0
    %137 = vmatprep.subr.mxu0 0.0
    %138 = vmatpush1.msra.mxu0 0.0
    %139 = vmatprep.subr.mxu0 0.0
    %140 = vmatpush1.msra.mxu0 0.0
    %141 = vmatprep.subr.mxu0 0.0
    %142 = vmatpush1.msra.mxu0 0.0
    %143 = vmatprep.subr.mxu0 0.0
    %144 = vmatpush1.msra.mxu0 0.0
    %145 = vmatprep.subr.mxu0 0.0
    %146 = vmatpush1.msra.mxu0 0.0
    %147 = vmatprep.subr.mxu0 0.0
    %148 = vmatpush1.msra.mxu0 0.0
    %149 = vmatprep.subr.mxu0 0.0
    %150 = vmatpush1.msra.mxu0 0.0
    %151 = vmatprep.subr.mxu0 0.0
    %152 = vmatpush1.msra.mxu0 0.0
    %153 = vmatprep.subr.mxu0 0.0
    %154 = vmatpush1.msra.mxu0 0.0
    %155 = vmatprep.subr.mxu0 0.0
    %156 = vmatpush1.msra.mxu0 0.0
    %157 = vmatprep.subr.mxu0 0.0
    %158 = vmatpush1.msra.mxu0 0.0
    %159 = vmatprep.subr.mxu0 0.0
    %160 = vmatpush1.msra.mxu0 0.0
    %161 = vmatprep.subr.mxu0 0.0
    %162 = vmatpush1.msra.mxu0 0.0
    %163 = vmatprep.subr.mxu0 0.0
    %164 = vmatpush1.msra.mxu0 0.0
    %165 = vmatprep.subr.mxu0 0.0
    %166 = vmatpush1.msra.mxu0 0.0
    %167 = vmatprep.mubr.f32.mxu0 0.0
    %168 = vmatmul.mubr.f32.gmra.mrb[0].mxu0 %v97
    %v169 = vpop.f32.mrb[0].mxu0
    %v170 = vadd.f32 %v93, %v169
    %v171 = vpop.f32.mrb[0].mxu0
    %172 = vdwg.mxu0
    %vm173 = vcmp.ge.f32.partialorder %v170, 0.0
    %v174 = vmul.f32 %v170, 0.2
    %v175 = vsel %vm173, %v170, %v174
    %v176 = vld [vmem:[#allocation5] sm:$0xff]
    %v177 = vld [vmem:[#allocation5 + $0x8] sm:$0xff]
    %v178 = vld [vmem:[#allocation5 + $0x10] sm:$0xff]
    %v179 = vld [vmem:[#allocation5 + $0x18] sm:$0xff]
    %v180 = vld [vmem:[%s5] sm:$0x1]
    %v182 = vlaneseq
    %v183 = vshrl.u32 %v182, 7
    %v184 = vsub.s32 0, %v183
    %v185 = vrot.slane %v180, %v184
    %vm187 = vcmask 261120
    %v189 = vsel %vm187, %v175, 0
    %191 = vmatprep.subr.mxu0 0.0
    %192 = vmatpush1.msra.mxu0 %v176
    %193 = vmatprep.subr.mxu0 0.0
    %194 = vmatpush1.msra.mxu0 %v177
    %195 = vmatprep.subr.mxu0 0.0
    %196 = vmatpush1.msra.mxu0 %v178
    %197 = vmatprep.subr.mxu0 0.0
    %198 = vmatpush1.msra.mxu0 %v179
    %199 = vmatprep.subr.mxu0 0.0
    %200 = vmatpush1.msra.mxu0 0.0
    %201 = vmatprep.subr.mxu0 0.0
    %202 = vmatpush1.msra.mxu0 0.0
    %203 = vmatprep.subr.mxu0 0.0
    %204 = vmatpush1.msra.mxu0 0.0
    %205 = vmatprep.subr.mxu0 0.0
    %206 = vmatpush1.msra.mxu0 0.0
    %207 = vmatprep.subr.mxu0 0.0
    %208 = vmatpush1.msra.mxu0 0.0
    %209 = vmatprep.subr.mxu0 0.0
    %210 = vmatpush1.msra.mxu0 0.0
    %211 = vmatprep.subr.mxu0 0.0
    %212 = vmatpush1.msra.mxu0 0.0
    %213 = vmatprep.subr.mxu0 0.0
    %214 = vmatpush1.msra.mxu0 0.0
    %215 = vmatprep.subr.mxu0 0.0
    %216 = vmatpush1.msra.mxu0 0.0
    %217 = vmatprep.subr.mxu0 0.0
    %218 = vmatpush1.msra.mxu0 0.0
    %219 = vmatprep.subr.mxu0 0.0
    %220 = vmatpush1.msra.mxu0 0.0
    %221 = vmatprep.subr.mxu0 0.0
    %222 = vmatpush1.msra.mxu0 0.0
    %223 = vmatprep.subr.mxu0 0.0
    %224 = vmatpush1.msra.mxu0 0.0
    %225 = vmatprep.subr.mxu0 0.0
    %226 = vmatpush1.msra.mxu0 0.0
    %227 = vmatprep.subr.mxu0 0.0
    %228 = vmatpush1.msra.mxu0 0.0
    %229 = vmatprep.subr.mxu0 0.0
    %230 = vmatpush1.msra.mxu0 0.0
    %231 = vmatprep.subr.mxu0 0.0
    %232 = vmatpush1.msra.mxu0 0.0
    %233 = vmatprep.subr.mxu0 0.0
    %234 = vmatpush1.msra.mxu0 0.0
    %235 = vmatprep.subr.mxu0 0.0
    %236 = vmatpush1.msra.mxu0 0.0
    %237 = vmatprep.subr.mxu0 0.0
    %238 = vmatpush1.msra.mxu0 0.0
    %239 = vmatprep.subr.mxu0 0.0
    %240 = vmatpush1.msra.mxu0 0.0
    %241 = vmatprep.subr.mxu0 0.0
    %242 = vmatpush1.msra.mxu0 0.0
    %243 = vmatprep.subr.mxu0 0.0
    %244 = vmatpush1.msra.mxu0 0.0
    %245 = vmatprep.subr.mxu0 0.0
    %246 = vmatpush1.msra.mxu0 0.0
    %247 = vmatprep.subr.mxu0 0.0
    %248 = vmatpush1.msra.mxu0 0.0
    %249 = vmatprep.subr.mxu0 0.0
    %250 = vmatpush1.msra.mxu0 0.0
    %251 = vmatprep.subr.mxu0 0.0
    %252 = vmatpush1.msra.mxu0 0.0
    %253 = vmatprep.subr.mxu0 0.0
    %254 = vmatpush1.msra.mxu0 0.0
    %255 = vmatprep.mubr.f32.mxu0 0.0
    %256 = vmatmul.mubr.f32.gmra.mrb[0].mxu0 %v189
    %v257 = vpop.f32.mrb[0].mxu0
    %v258 = vadd.f32 %v185, %v257
    %v259 = vpop.f32.mrb[0].mxu0
    %260 = vdwg.mxu0
    %vm261 = vcmp.ge.f32.partialorder %v258, 0.0
    %v262 = vmul.f32 %v258, 0.2
    %v263 = vsel %vm261, %v258, %v262
    %v264 = vld [vmem:[#allocation7] sm:$0xff]
    %v265 = vld [vmem:[#allocation7 + $0x8] sm:$0xff]
    %v266 = vld [vmem:[#allocation7 + $0x10] sm:$0xff]
    %v267 = vld [vmem:[#allocation7 + $0x18] sm:$0xff]
    %v268 = vld [vmem:[#allocation7 + $0x20] sm:$0xff]
    %v269 = vld [vmem:[#allocation7 + $0x28] sm:$0xff]
    %v270 = vld [vmem:[#allocation7 + $0x30] sm:$0xff]
    %v271 = vld [vmem:[#allocation7 + $0x38] sm:$0xff]
    %v272 = vld [vmem:[%s7] sm:$0x3]
    %v274 = vlaneseq
    %v275 = vshrl.u32 %v274, 7
    %v276 = vsub.s32 0, %v275
    %v277 = vrot.slane %v272, %v276
    %v278 = vlaneseq
    %v279 = vshrl.u32 %v278, 7
    %v280 = vsub.s32 1, %v279
    %v281 = vrot.slane %v272, %v280
    %v285 = vsel %vm187, %v263, 0
    %287 = vmatprep.subr.mxu0 %v265
    %288 = vmatpush1.msra.mxu0 %v264
    %289 = vmatprep.subr.mxu0 %v267
    %290 = vmatpush1.msra.mxu0 %v266
    %291 = vmatprep.subr.mxu0 %v269
    %292 = vmatpush1.msra.mxu0 %v268
    %293 = vmatprep.subr.mxu0 %v271
    %294 = vmatpush1.msra.mxu0 %v270
    %295 = vmatprep.subr.mxu0 0.0
    %296 = vmatpush1.msra.mxu0 0.0
    %297 = vmatprep.subr.mxu0 0.0
    %298 = vmatpush1.msra.mxu0 0.0
    %299 = vmatprep.subr.mxu0 0.0
    %300 = vmatpush1.msra.mxu0 0.0
    %301 = vmatprep.subr.mxu0 0.0
    %302 = vmatpush1.msra.mxu0 0.0
    %303 = vmatprep.subr.mxu0 0.0
    %304 = vmatpush1.msra.mxu0 0.0
    %305 = vmatprep.subr.mxu0 0.0
    %306 = vmatpush1.msra.mxu0 0.0
    %307 = vmatprep.subr.mxu0 0.0
    %308 = vmatpush1.msra.mxu0 0.0
    %309 = vmatprep.subr.mxu0 0.0
    %310 = vmatpush1.msra.mxu0 0.0
    %311 = vmatprep.subr.mxu0 0.0
    %312 = vmatpush1.msra.mxu0 0.0
    %313 = vmatprep.subr.mxu0 0.0
    %314 = vmatpush1.msra.mxu0 0.0
    %315 = vmatprep.subr.mxu0 0.0
    %316 = vmatpush1.msra.mxu0 0.0
    %317 = vmatprep.subr.mxu0 0.0
    %318 = vmatpush1.msra.mxu0 0.0
    %319 = vmatprep.subr.mxu0 0.0
    %320 = vmatpush1.msra.mxu0 0.0
    %321 = vmatprep.subr.mxu0 0.0
    %322 = vmatpush1.msra.mxu0 0.0
    %323 = vmatprep.subr.mxu0 0.0
    %324 = vmatpush1.msra.mxu0 0.0
    %325 = vmatprep.subr.mxu0 0.0
    %326 = vmatpush1.msra.mxu0 0.0
    %327 = vmatprep.subr.mxu0 0.0
    %328 = vmatpush1.msra.mxu0 0.0
    %329 = vmatprep.subr.mxu0 0.0
    %330 = vmatpush1.msra.mxu0 0.0
    %331 = vmatprep.subr.mxu0 0.0
    %332 = vmatpush1.msra.mxu0 0.0
    %333 = vmatprep.subr.mxu0 0.0
    %334 = vmatpush1.msra.mxu0 0.0
    %335 = vmatprep.subr.mxu0 0.0
    %336 = vmatpush1.msra.mxu0 0.0
    %337 = vmatprep.subr.mxu0 0.0
    %338 = vmatpush1.msra.mxu0 0.0
    %339 = vmatprep.subr.mxu0 0.0
    %340 = vmatpush1.msra.mxu0 0.0
    %341 = vmatprep.subr.mxu0 0.0
    %342 = vmatpush1.msra.mxu0 0.0
    %343 = vmatprep.subr.mxu0 0.0
    %344 = vmatpush1.msra.mxu0 0.0
    %345 = vmatprep.subr.mxu0 0.0
    %346 = vmatpush1.msra.mxu0 0.0
    %347 = vmatprep.subr.mxu0 0.0
    %348 = vmatpush1.msra.mxu0 0.0
    %349 = vmatprep.subr.mxu0 0.0
    %350 = vmatpush1.msra.mxu0 0.0
    %351 = vmatprep.mubr.f32.mxu0 0.0
    %352 = vmatmul.mubr.f32.gmra.mrb[0].mxu0 %v285
    %v353 = vpop.f32.mrb[0].mxu0
    %v354 = vadd.f32 %v277, %v353
    %v355 = vpop.f32.mrb[0].mxu0
    %v356 = vadd.f32 %v281, %v355
    %357 = vdwg.mxu0
    %v358 = vld [vmem:[%s8] sm:$0xff]
    %v359 = vmul.f32 %v356, 0.5
    %v360 = vmul.f32 %v359, 1.442695
    %v361 = vpow.pop %v360
    %v362 = vmul.f32 %v358, %v361
    %v363 = vadd.f32 %v354, %v362
    %364 = vst [vmem:[#allocation8] sm:$0xff] %v363
    %365 = vst [vmem:[#allocation9] sm:$0xff] %v354
    %366 = vst [vmem:[#allocation9 + $0x8] sm:$0xff] %v356
    // Predicated region
    $region50: #{tpu_custom_call.1} parent=1 // pred_check
      _
    $region51: #{tpu_custom_call.1} parent=1 // pred_check_branch
      %368 = sbr.rel (0) target = $region53
    $region52: #{tpu_custom_call.1} parent=1 // pred_region
      %s370 = ssub.s32 128, 128
      %371 = vsyncadd [#allocation4], %s370
      %s373 = sshll.u32 [#allocation8], 4
      %s374 = int_to_ptr.vmem [resolvable:$true] %s373
      %376 = dma.vmem_to_hbm [thread:$0]  %s374, 128, %s9, [#allocation4]
    $region53: #{tpu_custom_call.1} parent=1 // pred_fallthru
      _
    // Predicated region
    $region54: #{tpu_custom_call.1} parent=1 // pred_check
      _
    $region55: #{tpu_custom_call.1} parent=1 // pred_check_branch
      %378 = sbr.rel (0) target = $region57
    $region56: #{tpu_custom_call.1} parent=1 // pred_region
      %s380 = ssub.s32 256, 256
      %381 = vsyncadd [#allocation10], %s380
      %s383 = sshll.u32 [#allocation9], 4
      %s384 = int_to_ptr.vmem [resolvable:$true] %s383
      %386 = dma.vmem_to_hbm [thread:$0]  %s384, 256, %s10, [#allocation10]
    $region57: #{tpu_custom_call.1} parent=1 // pred_fallthru
      _
    // Predicated region
    $region58: #{tpu_custom_call.1} parent=1 // pred_check
      _
    $region59: #{tpu_custom_call.1} parent=1 // pred_check_branch
      %388 = sbr.rel (0) target = $region61
    $region60: #{tpu_custom_call.1} parent=1 // pred_region
      %389 = dma.done [#allocation4], 128
    $region61: #{tpu_custom_call.1} parent=1 // pred_fallthru
      _
    // Predicated region
    $region62: #{tpu_custom_call.1} parent=1 // pred_check
      _
    $region63: #{tpu_custom_call.1} parent=1 // pred_check_branch
      %391 = sbr.rel (0) target = $region65
    $region64: #{tpu_custom_call.1} parent=1 // pred_region
      %392 = dma.done [#allocation10], 256
    $region65: #{tpu_custom_call.1} parent=1 // pred_fallthru
      _
    %393 = vsyncpa [#allocation3], 1
    %394 = vsyncpa [#allocation6], 1
    %395 = vsyncpa [#allocation4], 1
    %396 = vsyncpa [#allocation10], 1

</llo_original>
